<compile_context>
chip_gen: v5e
topology: v5e:2x2
jax: 0.10.0
libtpu: 0.0.40
codegen_flags: <defaults>
</compile_context>

<pallas_src>
import functools

import jax
import jax.numpy as jnp
from jax.experimental import pallas as pl
from jax.experimental.pallas import tpu as pltpu


_TM_CAP = 512
_TK_CAP = 1024
_TN_CAP = 512


def _round_up(x: int, m: int) -> int:
    return ((x + m - 1) // m) * m


def _pick_tile(dim_pad: int, align: int, cap: int) -> int:
    """Largest multiple of `align` that divides dim_pad and is <= cap."""
    units = dim_pad // align
    max_units = max(1, min(units, cap // align))
    for u in range(max_units, 0, -1):
        if units % u == 0:
            return u * align
    return align


@functools.lru_cache(maxsize=None)
def _vmem_budget_bytes() -> int:
    # Generation-aware cap: 3/4 of physical VMEM, leaving headroom for
    # Mosaic internal scratch (v7x: ~48 MiB; v5e/v6e: ~96 MiB).
    try:
        cap = int(pltpu.get_tpu_info().vmem_capacity_bytes)
    except Exception:
        cap = 128 << 20
    return (cap * 3) // 4


# --------------------------------------------------------------------------
# Kernels
# --------------------------------------------------------------------------
def _linear_single_step_kernel(*refs, has_bias: bool):
    # Whole K fits in one tile: no accumulator, no conditionals.
    if has_bias:
        x_ref, w_ref, b_ref, o_ref = refs
    else:
        x_ref, w_ref, o_ref = refs
        b_ref = None
    acc = jnp.dot(x_ref[...], w_ref[...], preferred_element_type=jnp.float32)
    if b_ref is not None:
        acc = acc + b_ref[...]
    o_ref[...] = acc.astype(o_ref.dtype)


def _linear_multi_step_kernel(*refs, has_bias: bool, acc_in_out: bool):
    # Tiled (M, N, K) grid, reduction axis last.
    if acc_in_out:
        # f32 output: accumulate directly into the resident output block.
        if has_bias:
            x_ref, w_ref, b_ref, o_ref = refs
        else:
            x_ref, w_ref, o_ref = refs
            b_ref = None
        acc_ref = o_ref
    else:
        if has_bias:
            x_ref, w_ref, b_ref, o_ref, acc_ref = refs
        else:
            x_ref, w_ref, o_ref, acc_ref = refs
            b_ref = None

    k = pl.program_id(2)

    @pl.when(k == 0)
    def _():
        acc_ref[...] = jnp.zeros_like(acc_ref)

    acc_ref[...] += jnp.dot(x_ref[...], w_ref[...],
                            preferred_element_type=jnp.float32)

    needs_final = (b_ref is not None) or (not acc_in_out)
    if needs_final:
        @pl.when(k == pl.num_programs(2) - 1)
        def _():
            res = acc_ref[...]
            if b_ref is not None:
                res = res + b_ref[...]
            o_ref[...] = res.astype(o_ref.dtype)


# --------------------------------------------------------------------------
# Wrapper
# --------------------------------------------------------------------------
@functools.partial(jax.jit, static_argnames=("has_bias",))
def _toy_linear_impl(x, weight, bias, *, has_bias: bool):
    batch, in_features = x.shape
    out_features, in_features_w = weight.shape
    assert in_features == in_features_w

    out_dtype = x.dtype
    itemsize = jnp.dtype(x.dtype).itemsize
    out_itemsize = jnp.dtype(out_dtype).itemsize
    # Sub-32-bit dtypes pack along sublanes: 8 (f32) / 16 (bf16) / 32 (int8).
    sub = 8 * max(1, 4 // itemsize)

    # Pad only to hardware alignment, never up to tile multiples.
    M = _round_up(batch, sub)
    K = _round_up(in_features, 128)
    N = _round_up(out_features, 128)

    # Tiles divide the aligned dims exactly (no extra zero work).
    tm = _pick_tile(M, sub, _TM_CAP)
    tk = _pick_tile(K, 128, _TK_CAP)
    tn = _pick_tile(N, 128, _TN_CAP)

    # ---- Operand preparation (skip copies when already aligned) -----------
    if (M, K) == (batch, in_features):
        x_p = x
    else:
        x_p = jnp.pad(x, ((0, M - batch), (0, K - in_features)))

    # One-time [K, N] weight layout so the in-kernel dot needs no RHS
    # relayout (XLA fuses transpose+pad into a single copy).
    w_t = weight.T
    if (K, N) != (in_features, out_features):
        w_t = jnp.pad(w_t, ((0, K - in_features), (0, N - out_features)))

    operands = [x_p, w_t]

    single_k = (K == tk)
    acc_in_out = jnp.dtype(out_dtype) == jnp.float32
    use_scratch = (not single_k) and (not acc_in_out)

    if single_k:
        grid = (M // tm, N // tn)
        x_spec = pl.BlockSpec((tm, tk), lambda i, j: (i, 0))
        w_spec = pl.BlockSpec((tk, tn), lambda i, j: (0, j))
        b_spec = pl.BlockSpec((1, tn), lambda i, j: (0, j))
        o_spec = pl.BlockSpec((tm, tn), lambda i, j: (i, j))
        dim_sem = ("parallel", "parallel")
        kernel = functools.partial(_linear_single_step_kernel,
                                   has_bias=has_bias)
    else:
        grid = (M // tm, N // tn, K // tk)
        x_spec = pl.BlockSpec((tm, tk), lambda i, j, k: (i, k))
        w_spec = pl.BlockSpec((tk, tn), lambda i, j, k: (k, j))
        b_spec = pl.BlockSpec((1, tn), lambda i, j, k: (0, j))
        o_spec = pl.BlockSpec((tm, tn), lambda i, j, k: (i, j))
        dim_sem = ("parallel", "parallel", "arbitrary")
        kernel = functools.partial(_linear_multi_step_kernel,
                                   has_bias=has_bias, acc_in_out=acc_in_out)

    in_specs = [x_spec, w_spec]
    if has_bias:
        b_p = bias.astype(jnp.float32).reshape(1, out_features)
        if N != out_features:
            b_p = jnp.pad(b_p, ((0, 0), (0, N - out_features)))
        in_specs.append(b_spec)
        operands.append(b_p)

    scratch_shapes = [pltpu.VMEM((tm, tn), jnp.float32)] if use_scratch else []

    # Double-buffered inputs/outputs (+ bias, + optional f32 scratch).
    vmem_need = (2 * (tm * tk + tk * tn) * itemsize
                 + 2 * tm * tn * out_itemsize
                 + (2 * tn * 4 if has_bias else 0)
                 + (tm * tn * 4 if use_scratch else 0))
    vmem_limit = min(max(vmem_need * 3 // 2 + (4 << 20), 32 << 20),
                     _vmem_budget_bytes())

    cost = pl.CostEstimate(
        flops=2 * M * N * K,
        transcendentals=0,
        bytes_accessed=((M * K + K * N) * itemsize + M * N * out_itemsize
                        + (N * 4 if has_bias else 0)),
    )

    out_p = pl.pallas_call(
        kernel,
        out_shape=jax.ShapeDtypeStruct((M, N), out_dtype),
        grid_spec=pltpu.PrefetchScalarGridSpec(
            num_scalar_prefetch=0,
            grid=grid,
            in_specs=in_specs,
            out_specs=o_spec,
            scratch_shapes=scratch_shapes,
        ),
        compiler_params=pltpu.CompilerParams(
            dimension_semantics=dim_sem,
            vmem_limit_bytes=vmem_limit,
        ),
        cost_estimate=cost,
    )(*operands)

    if (M, N) == (batch, out_features):
        return out_p
    return out_p[:batch, :out_features]


def toy_linear(x, weight, bias=None):
    """F.linear semantics: y = x @ weight.T + bias.

    x:      [batch, in_features]
    weight: [out_features, in_features]
    bias:   [out_features] or None
    """
    if bias is None:
        return _toy_linear_impl(x, weight, None, has_bias=False)
    return _toy_linear_impl(x, weight, bias, has_bias=True)


if __name__ == "__main__":
    key = jax.random.PRNGKey(0)
    k_x, k_w, k_b, k_x2, k_w2 = jax.random.split(key, 5)

    # Small "toy" shapes from the module (single-K fast path, grid (1, 1)).
    batch, in_features, out_features = 8, 32, 16
    x = jax.random.normal(k_x, (batch, in_features), dtype=jnp.float32)
    weight = jax.random.normal(
        k_w, (out_features, in_features), dtype=jnp.float32) * 0.1
    bias = jax.random.normal(k_b, (out_features,), dtype=jnp.float32) * 0.1

    # With-bias path.
    y = toy_linear(x, weight, bias)
    jax.block_until_ready(y)
    y_ref = x @ weight.T + bias
    assert y.shape == (batch, out_features)
    assert jnp.allclose(y, y_ref, atol=1e-5, rtol=1e-5)

    # No-bias path (module supports bias=False).
    y_nb = toy_linear(x, weight, None)
    jax.block_until_ready(y_nb)
    assert jnp.allclose(y_nb, x @ weight.T, atol=1e-5, rtol=1e-5)

    # Larger-K check exercising the multi-K-step accumulate-into-output path.
    b2, i2, o2 = 16, 2048, 256
    x2 = jax.random.normal(k_x2, (b2, i2), dtype=jnp.float32) * 0.05
    w2 = jax.random.normal(k_w2, (o2, i2), dtype=jnp.float32) * 0.05
    y2 = toy_linear(x2, w2, None)
    jax.block_until_ready(y2)
    y2_ref = x2 @ w2.T
    assert jnp.allclose(y2, y2_ref, atol=1e-2, rtol=1e-2)

    print("KERNEL_OK")
</pallas_src>

<mosaic_0001>
module attributes {stable_mosaic.version = 11 : i64} {
  func.func @_linear_single_step_kernel(%arg0: i32, %arg1: i32, %arg2: memref<8x128xf32, #tpu.memory_space<vmem>>, %arg3: memref<128x128xf32, #tpu.memory_space<vmem>>, %arg4: memref<1x128xf32, #tpu.memory_space<vmem>>, %arg5: memref<8x128xf32, #tpu.memory_space<vmem>>) attributes {dimension_semantics = [#tpu.dimension_semantics<parallel>, #tpu.dimension_semantics<parallel>], iteration_bounds = array<i64: 1, 1>, scalar_prefetch = 0 : i64, scratch_operands = 0 : i64, tpu.core_type = #tpu.core_type<tc>, window_params = [{transform_indices = @transform_0, window_bounds = array<i64: 8, 128>}, {transform_indices = @transform_1, window_bounds = array<i64: 128, 128>}, {transform_indices = @transform_2, window_bounds = array<i64: 1, 128>}, {transform_indices = @transform_3, window_bounds = array<i64: 8, 128>}]} {
    %c0 = arith.constant 0 : index
    %c0_0 = arith.constant 0 : index
    %0 = vector.load %arg2[%c0, %c0_0] : memref<8x128xf32, #tpu.memory_space<vmem>>, vector<8x128xf32>
    %c0_1 = arith.constant 0 : index
    %c0_2 = arith.constant 0 : index
    %1 = vector.load %arg3[%c0_1, %c0_2] : memref<128x128xf32, #tpu.memory_space<vmem>>, vector<128x128xf32>
    %cst = arith.constant dense<0.000000e+00> : vector<8x128xf32>
    %2 = tpu.matmul %0, %1, %cst {dimension_numbers = #tpu.dot_dimension_numbers<[1], [0], [0], [1], [0, 0, 1, 1], [], []>} : vector<8x128xf32>, vector<128x128xf32>, vector<8x128xf32> -> vector<8x128xf32>
    %c0_3 = arith.constant 0 : index
    %c0_4 = arith.constant 0 : index
    %3 = vector.load %arg4[%c0_3, %c0_4] : memref<1x128xf32, #tpu.memory_space<vmem>>, vector<1x128xf32>
    %4 = vector.broadcast %3 : vector<1x128xf32> to vector<8x128xf32>
    %5 = arith.addf %2, %4 : vector<8x128xf32>
    %c0_5 = arith.constant 0 : index
    %c0_6 = arith.constant 0 : index
    %6 = vector.load %arg5[%c0_5, %c0_6] : memref<8x128xf32, #tpu.memory_space<vmem>>, vector<8x128xf32>
    tpu.vector_store %arg5[%c0_5, %c0_6], %5 {strides = array<i32>} : memref<8x128xf32, #tpu.memory_space<vmem>>, vector<8x128xf32>,
    return
  }
  func.func @transform_0(%arg0: i32, %arg1: i32) -> (i32, i32) {
    %c0_i32 = arith.constant 0 : i32
    %c0_i32_0 = arith.constant 0 : i32
    return %arg0, %c0_i32 : i32, i32
  }
  func.func @transform_1(%arg0: i32, %arg1: i32) -> (i32, i32) {
    %c0_i32 = arith.constant 0 : i32
    %c0_i32_0 = arith.constant 0 : i32
    return %c0_i32, %arg1 : i32, i32
  }
  func.func @transform_2(%arg0: i32, %arg1: i32) -> (i32, i32) {
    %c0_i32 = arith.constant 0 : i32
    %c0_i32_0 = arith.constant 0 : i32
    return %c0_i32, %arg1 : i32, i32
  }
  func.func @transform_3(%arg0: i32, %arg1: i32) -> (i32, i32) {
    %c0_i32 = arith.constant 0 : i32
    return %arg0, %arg1 : i32, i32
  }
}

</mosaic_0001>

<llo_original>
// kernel: _toy_linear_impl.1
$region0: #{_toy_linear_impl.1}
  #allocation0 [shape = 'u32[]', space=smem, size = 0x4, offset = 0x4, fixed_abs, tag = 'smem constant byte address 0x4 - core index']
  #allocation1 [shape = 'u32[72,128]{1,0:T(1,128)}', space=vmem, size = 0x9000, scoped, tag = 'internal scratch']
  %s0 = inlined_call_operand.vmem [shape: f32[8,128], index: 0, kind: input, shape index: {}]
  %s1 = inlined_call_operand.vmem [shape: f32[128,128], index: 1, kind: input, shape index: {}]
  %s2 = inlined_call_operand.vmem [shape: f32[1,128], index: 2, kind: input, shape index: {}]
  %s3 = inlined_call_operand.hbm [shape: f32[8,128], index: 3, kind: output, shape index: {}]
  %s4 = sld [smem:[#allocation0]]
  $region22: #{_toy_linear_impl.1} parent=0
    _
  %s6 = ssub.s32 1, %s4
  %s7 = scalar_select 0, %s6, %s4
  $region1: #{_toy_linear_impl.1} parent=0
    #allocation2 [shape = 'u8[4096]{0}', space=vmem, size = 0x1000, scoped, tag = 'output window, operand 0, single buffered']
    #allocation3 [shape = 's32[1]{0}', space=sflag, size = 0x4, scoped, tag = 'scoped memory for _toy_linear_impl.1']
    %8 = vsyncpa [#allocation3], 0
    // Predicated region
    $region2: #{_toy_linear_impl.1} parent=1 // pred_check
      _
    $region3: #{_toy_linear_impl.1} parent=1 // pred_check_branch
      %10 = sbr.rel (0) target = $region5
    $region4: #{_toy_linear_impl.1} parent=1 // pred_region
      _
    $region5: #{_toy_linear_impl.1} parent=1 // pred_fallthru
      _
    // Predicated region
    $region6: #{_toy_linear_impl.1} parent=1 // pred_check
      _
    $region7: #{_toy_linear_impl.1} parent=1 // pred_check_branch
      %12 = sbr.rel (0) target = $region9
    $region8: #{_toy_linear_impl.1} parent=1 // pred_region
      _
    $region9: #{_toy_linear_impl.1} parent=1 // pred_fallthru
      _
    // Predicated region
    $region10: #{_toy_linear_impl.1} parent=1 // pred_check
      _
    $region11: #{_toy_linear_impl.1} parent=1 // pred_check_branch
      %14 = sbr.rel (0) target = $region13
    $region12: #{_toy_linear_impl.1} parent=1 // pred_region
      _
    $region13: #{_toy_linear_impl.1} parent=1 // pred_fallthru
      _
    %v15 = vld [vmem:[%s0] sm:$0xff]
    %v16 = vld [vmem:[%s1] sm:$0xff]
    %v17 = vld [vmem:[%s1 + $0x8] sm:$0xff]
    %v18 = vld [vmem:[%s1 + $0x10] sm:$0xff]
    %v19 = vld [vmem:[%s1 + $0x18] sm:$0xff]
    %v20 = vld [vmem:[%s1 + $0x20] sm:$0xff]
    %v21 = vld [vmem:[%s1 + $0x28] sm:$0xff]
    %v22 = vld [vmem:[%s1 + $0x30] sm:$0xff]
    %v23 = vld [vmem:[%s1 + $0x38] sm:$0xff]
    %v24 = vld [vmem:[%s1 + $0x40] sm:$0xff]
    %v25 = vld [vmem:[%s1 + $0x48] sm:$0xff]
    %v26 = vld [vmem:[%s1 + $0x50] sm:$0xff]
    %v27 = vld [vmem:[%s1 + $0x58] sm:$0xff]
    %v28 = vld [vmem:[%s1 + $0x60] sm:$0xff]
    %v29 = vld [vmem:[%s1 + $0x68] sm:$0xff]
    %v30 = vld [vmem:[%s1 + $0x70] sm:$0xff]
    %v31 = vld [vmem:[%s1 + $0x78] sm:$0xff]
    %v32 = vld [vmem:[%s2] sm:$0x1]
    %v34 = vperm.slane %v32, 0
    %36 = vmatpush.msra.mxu0 %v31
    %37 = vmatpush.msra.mxu0 %v30
    %38 = vmatpush.msra.mxu0 %v29
    %39 = vmatpush.msra.mxu0 %v28
    %40 = vmatpush.msra.mxu0 %v27
    %41 = vmatpush.msra.mxu0 %v26
    %42 = vmatpush.msra.mxu0 %v25
    %43 = vmatpush.msra.mxu0 %v24
    %44 = vmatpush.msra.mxu0 %v23
    %45 = vmatpush.msra.mxu0 %v22
    %46 = vmatpush.msra.mxu0 %v21
    %47 = vmatpush.msra.mxu0 %v20
    %48 = vmatpush.msra.mxu0 %v19
    %49 = vmatpush.msra.mxu0 %v18
    %50 = vmatpush.msra.mxu0 %v17
    %51 = vmatpush.msra.mxu0 %v16
    %52 = vmatmul.f32.gmra.mxu0 %v15
    %v53 = vpop.f32.mrf.mxu0
    %v54 = vadd.f32 %v34, %v53
    %55 = vdwg.mxu0
    %56 = vst [vmem:[#allocation2] sm:$0xff] %v54
    // Predicated region
    $region14: #{_toy_linear_impl.1} parent=1 // pred_check
      _
    $region15: #{_toy_linear_impl.1} parent=1 // pred_check_branch
      %58 = sbr.rel (0) target = $region17
    $region16: #{_toy_linear_impl.1} parent=1 // pred_region
      %60 = vsyncadd [#allocation3], 0
      %s62 = sshll.u32 [#allocation2], 4
      %s63 = int_to_ptr.vmem [resolvable:$true] %s62
      %s64 = sshll.u32 %s3, 4
      %s65 = int_to_ptr.hbm [resolvable:$true] %s64
      %67 = dma.vmem_to_hbm [thread:$0]  %s63, 128, %s65, [#allocation3]
    $region17: #{_toy_linear_impl.1} parent=1 // pred_fallthru
      _
    // Predicated region
    $region18: #{_toy_linear_impl.1} parent=1 // pred_check
      _
    $region19: #{_toy_linear_impl.1} parent=1 // pred_check_branch
      %69 = sbr.rel (0) target = $region21
    $region20: #{_toy_linear_impl.1} parent=1 // pred_region
      %71 = dma.done [#allocation3], 128
    $region21: #{_toy_linear_impl.1} parent=1 // pred_fallthru
      _
    %72 = vsyncpa [#allocation3], 1

</llo_original>
